<compile_context>
chip_gen: v7x
topology: tpu7x:2x2x1
jax: 0.10.0
libtpu: 0.0.40
codegen_flags: <defaults>
</compile_context>

<pallas_src>
import functools

import jax
import jax.numpy as jnp
from jax.experimental import pallas as pl
from jax.experimental.pallas import tpu as pltpu

_LANE = 128


def _round_up(x, m):
    return ((x + m - 1) // m) * m


def _pick_tm(batch, tm):
    """Batch tile: multiple of 8; large batches get big (>=256, mult-of-256) tiles but
    always >= 2 grid steps so v7x's two TensorCores both get work."""
    b8 = _round_up(batch, 8)
    tm = _round_up(max(tm, 8), 8)
    if tm >= b8:
        return b8                       # one tile covers the whole batch
    if b8 > 512 and tm >= 256:
        tm = _round_up(tm, 256)
        tm = min(tm, _round_up((b8 + 1) // 2, 256))   # keep grid length >= 2
    return tm


def mlp_kernel(x_ref, w1_ref, b1_ref, w2_ref, b2_ref, w3_ref, b3_ref, o_ref):
    # x_ref: (tm, D_in)   w1: (D_in, H_p)   w2: (H_p, H_p)   w3: (H_p, Dout_p)
    mxu_dtype = w1_ref.dtype
    x = x_ref[...].astype(mxu_dtype)          # cast in-register (no wrapper copy of x)

    # Layer 1: MXU matmul with f32 accumulation, bias + ReLU on the VPU.
    h1 = jnp.dot(x, w1_ref[...], preferred_element_type=jnp.float32) + b1_ref[...]
    h1 = jnp.maximum(h1, 0.0)
    # Dropout(p) in eval mode == identity.
    h1 = h1.astype(mxu_dtype)

    # Layer 2
    h2 = jnp.dot(h1, w2_ref[...], preferred_element_type=jnp.float32) + b2_ref[...]
    h2 = jnp.maximum(h2, 0.0)
    # Dropout(p) in eval mode == identity.
    h2 = h2.astype(mxu_dtype)

    # Layer 3 (no activation)
    out = jnp.dot(h2, w3_ref[...], preferred_element_type=jnp.float32) + b3_ref[...]
    o_ref[...] = out.astype(o_ref.dtype)


def prepare_params(w1, b1, w2, b2, w3, b3, *, use_bf16=True):
    """Pad (lane-align) and cast weights ONCE, outside the jitted forward.
    Weights must already be transposed to (fan_in, fan_out) for y = x @ W + b.
    Zero padding is exact: padded K rows/cols contribute 0, padded hidden columns
    have zero weight + zero bias so ReLU keeps them at 0."""
    f32 = jnp.float32
    wd = jnp.bfloat16 if use_bf16 else f32

    d_in, h1 = w1.shape
    h2 = w2.shape[1]
    d_out = w3.shape[1]
    h1_p = _round_up(h1, _LANE)
    h2_p = _round_up(h2, _LANE)
    d_out_p = _round_up(d_out, _LANE)

    w1_p = jnp.pad(w1.astype(f32), ((0, 0), (0, h1_p - h1))).astype(wd)
    w2_p = jnp.pad(w2.astype(f32), ((0, h1_p - h1), (0, h2_p - h2))).astype(wd)
    w3_p = jnp.pad(w3.astype(f32), ((0, h2_p - h2), (0, d_out_p - d_out))).astype(wd)
    b1_p = jnp.pad(jnp.reshape(b1, (1, -1)).astype(f32), ((0, 0), (0, h1_p - h1)))
    b2_p = jnp.pad(jnp.reshape(b2, (1, -1)).astype(f32), ((0, 0), (0, h2_p - h2)))
    b3_p = jnp.pad(jnp.reshape(b3, (1, -1)).astype(f32), ((0, 0), (0, d_out_p - d_out)))
    return (w1_p, b1_p, w2_p, b2_p, w3_p, b3_p)


@functools.partial(jax.jit, static_argnames=("d_out", "tm"))
def mlp_forward(x, params, *, d_out, tm=2048):
    """x: (B, D_in) in its native dtype (f32 or bf16); params from prepare_params."""
    w1_p, b1_p, w2_p, b2_p, w3_p, b3_p = params
    B, d_in = x.shape
    h1_p = w1_p.shape[1]
    h2_p = w2_p.shape[1]
    d_out_p = w3_p.shape[1]

    tm_eff = _pick_tm(B, tm)
    B_p = _round_up(B, tm_eff)
    if B_p != B:
        # Only pad batch when the tile does not divide it (rare; review item 3).
        x = jnp.pad(x, ((0, B_p - B), (0, 0)))
    grid = (B_p // tm_eff,)

    out_dtype = x.dtype

    # VMEM budget: x tile double-buffered + single-buffered weights/biases +
    # output double-buffered + h1/h2 intermediates headroom.  Floor 32 MiB,
    # cap 48 MiB (safe on v5e scoped VMEM and under v7x's 64 MiB physical).
    vmem_est = (
        2 * tm_eff * d_in * x.dtype.itemsize
        + (w1_p.size + w2_p.size + w3_p.size) * w1_p.dtype.itemsize
        + (b1_p.size + b2_p.size + b3_p.size) * 4
        + 2 * tm_eff * d_out_p * jnp.dtype(out_dtype).itemsize
        + 4 * tm_eff * max(h1_p, h2_p) * 4
    )
    vmem_limit = int(min(max(int(vmem_est * 1.25), 32 * 1024 * 1024),
                         48 * 1024 * 1024))

    resident = pl.Buffered(1)   # weights/biases never change block index

    out_p = pl.pallas_call(
        mlp_kernel,
        out_shape=jax.ShapeDtypeStruct((B_p, d_out_p), out_dtype),
        grid_spec=pltpu.PrefetchScalarGridSpec(
            num_scalar_prefetch=0,
            grid=grid,
            in_specs=[
                # x tile: full D_in last dim (== array dim, so legal), no lane pad.
                pl.BlockSpec((tm_eff, d_in), lambda i: (i, 0)),
                pl.BlockSpec((d_in, h1_p), lambda i: (0, 0), pipeline_mode=resident),
                pl.BlockSpec((1, h1_p), lambda i: (0, 0), pipeline_mode=resident),
                pl.BlockSpec((h1_p, h2_p), lambda i: (0, 0), pipeline_mode=resident),
                pl.BlockSpec((1, h2_p), lambda i: (0, 0), pipeline_mode=resident),
                pl.BlockSpec((h2_p, d_out_p), lambda i: (0, 0), pipeline_mode=resident),
                pl.BlockSpec((1, d_out_p), lambda i: (0, 0), pipeline_mode=resident),
            ],
            # Lane-dense 128-wide output tile -> unmasked stores.
            out_specs=pl.BlockSpec((tm_eff, d_out_p), lambda i: (i, 0)),
        ),
        compiler_params=pltpu.CompilerParams(
            dimension_semantics=("parallel",),     # batch tiles shard across TCs (v7x)
            vmem_limit_bytes=vmem_limit,
        ),
    )(x, w1_p, b1_p, w2_p, b2_p, w3_p, b3_p)

    # TODO(synk): fuse this slice into the consumer to avoid a separate pass over the
    #             padded output when chaining kernels.
    return out_p[:B, :d_out]


def init_linear(key, fan_in, fan_out, dtype=jnp.float32):
    """Mimics torch.nn.Linear default init (uniform +/- 1/sqrt(fan_in)).
    Returns W already transposed to (fan_in, fan_out) for y = x @ W + b."""
    k_w, k_b = jax.random.split(key)
    bound = 1.0 / (fan_in ** 0.5)
    w = jax.random.uniform(k_w, (fan_in, fan_out), dtype, minval=-bound, maxval=bound)
    b = jax.random.uniform(k_b, (1, fan_out), dtype, minval=-bound, maxval=bound)
    return w, b


def reference_forward(x, w1, b1, w2, b2, w3, b3):
    h1 = jnp.maximum(x @ w1 + b1, 0.0)
    h2 = jnp.maximum(h1 @ w2 + b2, 0.0)
    return h2 @ w3 + b3


if __name__ == "__main__":
    input_dim, hidden_dim, output_dim = 784, 256, 10

    key = jax.random.PRNGKey(0)
    kx1, kx2, k1, k2, k3 = jax.random.split(key, 5)

    w1, b1 = init_linear(k1, input_dim, hidden_dim)
    w2, b2 = init_linear(k2, hidden_dim, hidden_dim)
    w3, b3 = init_linear(k3, hidden_dim, output_dim)

    # --- f32 MXU operands, batch divisible by the (clamped) tile: tight check ---
    batch1 = 32
    x1 = jax.random.normal(kx1, (batch1, input_dim), jnp.float32)
    params_f32 = prepare_params(w1, b1, w2, b2, w3, b3, use_bf16=False)
    out1 = jax.block_until_ready(mlp_forward(x1, params_f32, d_out=output_dim))
    ref1 = reference_forward(x1, w1, b1, w2, b2, w3, b3)
    assert out1.shape == (batch1, output_dim)
    assert jnp.allclose(out1, ref1, atol=2e-4, rtol=2e-4), \
        float(jnp.max(jnp.abs(out1 - ref1)))

    # --- bf16 MXU operands (default fast path) + ragged batch (exercises the
    #     conditional batch pad and a multi-step grid): loose check ---
    batch2 = 40
    x2 = jax.random.normal(kx2, (batch2, input_dim), jnp.float32)
    params_bf16 = prepare_params(w1, b1, w2, b2, w3, b3, use_bf16=True)
    out2 = jax.block_until_ready(mlp_forward(x2, params_bf16, d_out=output_dim, tm=16))
    ref2 = reference_forward(x2, w1, b1, w2, b2, w3, b3)
    assert out2.shape == (batch2, output_dim)
    assert bool(jnp.all(jnp.isfinite(out2)))
    assert float(jnp.max(jnp.abs(out2 - ref2))) < 0.1

    print("KERNEL_OK")
</pallas_src>

<mosaic_0001>
module attributes {stable_mosaic.version = 11 : i64} {
  func.func @mlp_kernel(%arg0: i32, %arg1: memref<32x784xf32, #tpu.memory_space<vmem>>, %arg2: memref<784x256xf32, #tpu.memory_space<vmem>>, %arg3: memref<1x256xf32, #tpu.memory_space<vmem>>, %arg4: memref<256x256xf32, #tpu.memory_space<vmem>>, %arg5: memref<1x256xf32, #tpu.memory_space<vmem>>, %arg6: memref<256x128xf32, #tpu.memory_space<vmem>>, %arg7: memref<1x128xf32, #tpu.memory_space<vmem>>, %arg8: memref<32x128xf32, #tpu.memory_space<vmem>>) attributes {dimension_semantics = [#tpu.dimension_semantics<parallel>], iteration_bounds = array<i64: 1>, scalar_prefetch = 0 : i64, scratch_operands = 0 : i64, tpu.core_type = #tpu.core_type<tc>, window_params = [{transform_indices = @transform_0, window_bounds = array<i64: 32, 784>}, {pipeline_mode = #tpu.pipeline_mode<synchronous>, transform_indices = @transform_1, window_bounds = array<i64: 784, 256>}, {pipeline_mode = #tpu.pipeline_mode<synchronous>, transform_indices = @transform_2, window_bounds = array<i64: 1, 256>}, {pipeline_mode = #tpu.pipeline_mode<synchronous>, transform_indices = @transform_3, window_bounds = array<i64: 256, 256>}, {pipeline_mode = #tpu.pipeline_mode<synchronous>, transform_indices = @transform_4, window_bounds = array<i64: 1, 256>}, {pipeline_mode = #tpu.pipeline_mode<synchronous>, transform_indices = @transform_5, window_bounds = array<i64: 256, 128>}, {pipeline_mode = #tpu.pipeline_mode<synchronous>, transform_indices = @transform_6, window_bounds = array<i64: 1, 128>}, {transform_indices = @transform_7, window_bounds = array<i64: 32, 128>}]} {
    %c0 = arith.constant 0 : index
    %c0_0 = arith.constant 0 : index
    %0 = vector.load %arg1[%c0, %c0_0] : memref<32x784xf32, #tpu.memory_space<vmem>>, vector<32x784xf32>
    %c0_1 = arith.constant 0 : index
    %c0_2 = arith.constant 0 : index
    %1 = vector.load %arg2[%c0_1, %c0_2] : memref<784x256xf32, #tpu.memory_space<vmem>>, vector<784x256xf32>
    %cst = arith.constant dense<0.000000e+00> : vector<32x256xf32>
    %2 = tpu.matmul %0, %1, %cst {dimension_numbers = #tpu.dot_dimension_numbers<[1], [0], [0], [1], [0, 0, 1, 1], [], []>} : vector<32x784xf32>, vector<784x256xf32>, vector<32x256xf32> -> vector<32x256xf32>
    %c0_3 = arith.constant 0 : index
    %c0_4 = arith.constant 0 : index
    %3 = vector.load %arg3[%c0_3, %c0_4] : memref<1x256xf32, #tpu.memory_space<vmem>>, vector<1x256xf32>
    %4 = vector.broadcast %3 : vector<1x256xf32> to vector<32x256xf32>
    %5 = arith.addf %2, %4 : vector<32x256xf32>
    %cst_5 = arith.constant 0.000000e+00 : f32
    %6 = vector.broadcast %cst_5 : f32 to vector<32x256xf32>
    %7 = arith.maximumf %5, %6 : vector<32x256xf32>
    %c0_6 = arith.constant 0 : index
    %c0_7 = arith.constant 0 : index
    %8 = vector.load %arg4[%c0_6, %c0_7] : memref<256x256xf32, #tpu.memory_space<vmem>>, vector<256x256xf32>
    %cst_8 = arith.constant dense<0.000000e+00> : vector<32x256xf32>
    %9 = tpu.matmul %7, %8, %cst_8 {dimension_numbers = #tpu.dot_dimension_numbers<[1], [0], [0], [1], [0, 0, 1, 1], [], []>} : vector<32x256xf32>, vector<256x256xf32>, vector<32x256xf32> -> vector<32x256xf32>
    %c0_9 = arith.constant 0 : index
    %c0_10 = arith.constant 0 : index
    %10 = vector.load %arg5[%c0_9, %c0_10] : memref<1x256xf32, #tpu.memory_space<vmem>>, vector<1x256xf32>
    %11 = vector.broadcast %10 : vector<1x256xf32> to vector<32x256xf32>
    %12 = arith.addf %9, %11 : vector<32x256xf32>
    %cst_11 = arith.constant 0.000000e+00 : f32
    %13 = vector.broadcast %cst_11 : f32 to vector<32x256xf32>
    %14 = arith.maximumf %12, %13 : vector<32x256xf32>
    %c0_12 = arith.constant 0 : index
    %c0_13 = arith.constant 0 : index
    %15 = vector.load %arg6[%c0_12, %c0_13] : memref<256x128xf32, #tpu.memory_space<vmem>>, vector<256x128xf32>
    %cst_14 = arith.constant dense<0.000000e+00> : vector<32x128xf32>
    %16 = tpu.matmul %14, %15, %cst_14 {dimension_numbers = #tpu.dot_dimension_numbers<[1], [0], [0], [1], [0, 0, 1, 1], [], []>} : vector<32x256xf32>, vector<256x128xf32>, vector<32x128xf32> -> vector<32x128xf32>
    %c0_15 = arith.constant 0 : index
    %c0_16 = arith.constant 0 : index
    %17 = vector.load %arg7[%c0_15, %c0_16] : memref<1x128xf32, #tpu.memory_space<vmem>>, vector<1x128xf32>
    %18 = vector.broadcast %17 : vector<1x128xf32> to vector<32x128xf32>
    %19 = arith.addf %16, %18 : vector<32x128xf32>
    %c0_17 = arith.constant 0 : index
    %c0_18 = arith.constant 0 : index
    %20 = vector.load %arg8[%c0_17, %c0_18] : memref<32x128xf32, #tpu.memory_space<vmem>>, vector<32x128xf32>
    tpu.vector_store %arg8[%c0_17, %c0_18], %19 {strides = array<i32>} : memref<32x128xf32, #tpu.memory_space<vmem>>, vector<32x128xf32>,
    return
  }
  func.func @transform_0(%arg0: i32) -> (i32, i32) {
    %c0_i32 = arith.constant 0 : i32
    %c0_i32_0 = arith.constant 0 : i32
    return %arg0, %c0_i32 : i32, i32
  }
  func.func @transform_1(%arg0: i32) -> (i32, i32) {
    %c0_i32 = arith.constant 0 : i32
    %c0_i32_0 = arith.constant 0 : i32
    %c0_i32_1 = arith.constant 0 : i32
    return %c0_i32, %c0_i32_0 : i32, i32
  }
  func.func @transform_2(%arg0: i32) -> (i32, i32) {
    %c0_i32 = arith.constant 0 : i32
    %c0_i32_0 = arith.constant 0 : i32
    %c0_i32_1 = arith.constant 0 : i32
    return %c0_i32, %c0_i32_0 : i32, i32
  }
  func.func @transform_3(%arg0: i32) -> (i32, i32) {
    %c0_i32 = arith.constant 0 : i32
    %c0_i32_0 = arith.constant 0 : i32
    %c0_i32_1 = arith.constant 0 : i32
    return %c0_i32, %c0_i32_0 : i32, i32
  }
  func.func @transform_4(%arg0: i32) -> (i32, i32) {
    %c0_i32 = arith.constant 0 : i32
    %c0_i32_0 = arith.constant 0 : i32
    %c0_i32_1 = arith.constant 0 : i32
    return %c0_i32, %c0_i32_0 : i32, i32
  }
  func.func @transform_5(%arg0: i32) -> (i32, i32) {
    %c0_i32 = arith.constant 0 : i32
    %c0_i32_0 = arith.constant 0 : i32
    %c0_i32_1 = arith.constant 0 : i32
    return %c0_i32, %c0_i32_0 : i32, i32
  }
  func.func @transform_6(%arg0: i32) -> (i32, i32) {
    %c0_i32 = arith.constant 0 : i32
    %c0_i32_0 = arith.constant 0 : i32
    %c0_i32_1 = arith.constant 0 : i32
    return %c0_i32, %c0_i32_0 : i32, i32
  }
  func.func @transform_7(%arg0: i32) -> (i32, i32) {
    %c0_i32 = arith.constant 0 : i32
    %c0_i32_0 = arith.constant 0 : i32
    return %arg0, %c0_i32 : i32, i32
  }
}

</mosaic_0001>

<llo_original>
// kernel: mlp_forward.1
$region0: #{mlp_forward.1}
  #allocation0 [shape = 'u32[]', space=smem, size = 0x4, offset = 0x4, fixed_abs, tag = 'smem constant byte address 0x4 - core index']
  #allocation1 [shape = 'u32[144,128]{1,0:T(1,128)}', space=vmem, size = 0x12000, scoped, tag = 'internal scratch']
  %s0 = inlined_call_operand.hbm [shape: f32[32,784], index: 0, kind: input, shape index: {}]
  %s1 = inlined_call_operand.hbm [shape: f32[784,256], index: 1, kind: input, shape index: {}]
  %s2 = inlined_call_operand.vmem [shape: f32[1,256], index: 2, kind: input, shape index: {}]
  %s3 = inlined_call_operand.hbm [shape: f32[256,256], index: 3, kind: input, shape index: {}]
  %s4 = inlined_call_operand.vmem [shape: f32[1,256], index: 4, kind: input, shape index: {}]
  %s5 = inlined_call_operand.hbm [shape: f32[256,128], index: 5, kind: input, shape index: {}]
  %s6 = inlined_call_operand.vmem [shape: f32[1,128], index: 6, kind: input, shape index: {}]
  %s7 = inlined_call_operand.vmem [shape: f32[32,128], index: 7, kind: output, shape index: {}]
  %s8 = sld [smem:[#allocation0]]
  $region54: #{mlp_forward.1} parent=0
    _
  %s10 = ssub.s32 1, %s8
  %s11 = scalar_select 0, %s10, %s8
  $region1: #{mlp_forward.1} parent=0
    #allocation2 [shape = 'u8[114688]{0}', space=vmem, size = 0x1c000, scoped, tag = 'input window, operand 0, single buffered']
    #allocation3 [shape = 's32[1]{0}', space=sflag, size = 0x4, scoped, tag = 'scoped memory for mlp_forward.1']
    #allocation4 [shape = 'u8[802816]{0}', space=vmem, size = 0xc4000, scoped, tag = 'input window, operand 1, single buffered']
    #allocation5 [shape = 's32[1]{0}', space=sflag, size = 0x4, scoped, tag = 'scoped memory for mlp_forward.1']
    #allocation6 [shape = 'u8[262144]{0}', space=vmem, size = 0x40000, scoped, tag = 'input window, operand 3, single buffered']
    #allocation7 [shape = 'u8[131072]{0}', space=vmem, size = 0x20000, scoped, tag = 'input window, operand 5, single buffered']
    #allocation8 [shape = 's32[1]{0}', space=sflag, size = 0x4, scoped, tag = 'scoped memory for mlp_forward.1']
    %12 = vsyncpa [#allocation3], 0
    %13 = vsyncpa [#allocation5], 0
    %14 = vsyncpa [#allocation8], 0
    // Predicated region
    $region2: #{mlp_forward.1} parent=1 // pred_check
      _
    $region3: #{mlp_forward.1} parent=1 // pred_check_branch
      %16 = sbr.rel (0) target = $region5
    $region4: #{mlp_forward.1} parent=1 // pred_region
      %s18 = ssub.s32 3584, 3584
      %19 = vsyncadd [#allocation3], %s18
      %s20 = sshll.u32 [#allocation2], 4
      %s21 = int_to_ptr.vmem [resolvable:$true] %s20
      %26 = dma.hbm_to_vmem [thread:$0]  %s0, 3584, %s21, [#allocation3], 896, 896, 56
    $region5: #{mlp_forward.1} parent=1 // pred_fallthru
      _
    // Predicated region
    $region6: #{mlp_forward.1} parent=1 // pred_check
      _
    $region7: #{mlp_forward.1} parent=1 // pred_check_branch
      %28 = sbr.rel (0) target = $region9
    $region8: #{mlp_forward.1} parent=1 // pred_region
      %s30 = ssub.s32 25088, 25088
      %31 = vsyncadd [#allocation5], %s30
      %s32 = sshll.u32 [#allocation4], 4
      %s33 = int_to_ptr.vmem [resolvable:$true] %s32
      %38 = dma.hbm_to_vmem [thread:$0]  %s1, 25088, %s33, [#allocation5], 256, 256, 16
    $region9: #{mlp_forward.1} parent=1 // pred_fallthru
      _
    // Predicated region
    $region10: #{mlp_forward.1} parent=1 // pred_check
      _
    $region11: #{mlp_forward.1} parent=1 // pred_check_branch
      %40 = sbr.rel (0) target = $region13
    $region12: #{mlp_forward.1} parent=1 // pred_region
      _
    $region13: #{mlp_forward.1} parent=1 // pred_fallthru
      _
    // Predicated region
    $region14: #{mlp_forward.1} parent=1 // pred_check
      _
    $region15: #{mlp_forward.1} parent=1 // pred_check_branch
      %42 = sbr.rel (0) target = $region17
    $region16: #{mlp_forward.1} parent=1 // pred_region
      %s44 = ssub.s32 8192, 8192
      %45 = vsyncadd [#allocation5], %s44
      %s46 = sshll.u32 [#allocation6], 4
      %s47 = int_to_ptr.vmem [resolvable:$true] %s46
      %52 = dma.hbm_to_vmem [thread:$0]  %s3, 8192, %s47, [#allocation5], 256, 256, 16
    $region17: #{mlp_forward.1} parent=1 // pred_fallthru
      _
    // Predicated region
    $region18: #{mlp_forward.1} parent=1 // pred_check
      _
    $region19: #{mlp_forward.1} parent=1 // pred_check_branch
      %54 = sbr.rel (0) target = $region21
    $region20: #{mlp_forward.1} parent=1 // pred_region
      _
    $region21: #{mlp_forward.1} parent=1 // pred_fallthru
      _
    // Predicated region
    $region22: #{mlp_forward.1} parent=1 // pred_check
      _
    $region23: #{mlp_forward.1} parent=1 // pred_check_branch
      %56 = sbr.rel (0) target = $region25
    $region24: #{mlp_forward.1} parent=1 // pred_region
      %s58 = ssub.s32 4096, 4096
      %59 = vsyncadd [#allocation8], %s58
      %s60 = sshll.u32 [#allocation7], 4
      %s61 = int_to_ptr.vmem [resolvable:$true] %s60
      %66 = dma.hbm_to_vmem [thread:$0]  %s5, 4096, %s61, [#allocation8], 128, 128, 8
    $region25: #{mlp_forward.1} parent=1 // pred_fallthru
      _
    // Predicated region
    $region26: #{mlp_forward.1} parent=1 // pred_check
      _
    $region27: #{mlp_forward.1} parent=1 // pred_check_branch
      %68 = sbr.rel (0) target = $region29
    $region28: #{mlp_forward.1} parent=1 // pred_region
      _
    $region29: #{mlp_forward.1} parent=1 // pred_fallthru
      _
    // Predicated region
    $region30: #{mlp_forward.1} parent=1 // pred_check
      _
    $region31: #{mlp_forward.1} parent=1 // pred_check_branch
      %70 = sbr.rel (0) target = $region33
    $region32: #{mlp_forward.1} parent=1 // pred_region
      %71 = dma.done [#allocation3], 3584
    $region33: #{mlp_forward.1} parent=1 // pred_fallthru
      _
    // Predicated region
    $region34: #{mlp_forward.1} parent=1 // pred_check
      _
    $region35: #{mlp_forward.1} parent=1 // pred_check_branch
      %73 = sbr.rel (0) target = $region37
    $region36: #{mlp_forward.1} parent=1 // pred_region
      %74 = dma.done [#allocation5], 25088
    $region37: #{mlp_forward.1} parent=1 // pred_fallthru
      _
    // Predicated region
    $region38: #{mlp_forward.1} parent=1 // pred_check
      _
    $region39: #{mlp_forward.1} parent=1 // pred_check_branch
      %76 = sbr.rel (0) target = $region41
    $region40: #{mlp_forward.1} parent=1 // pred_region
      %77 = dma.done [#allocation5], 8192
    $region41: #{mlp_forward.1} parent=1 // pred_fallthru
      _
    // Predicated region
    $region42: #{mlp_forward.1} parent=1 // pred_check
      _
    $region43: #{mlp_forward.1} parent=1 // pred_check_branch
      %79 = sbr.rel (0) target = $region45
    $region44: #{mlp_forward.1} parent=1 // pred_region
      %80 = dma.done [#allocation8], 4096
    $region45: #{mlp_forward.1} parent=1 // pred_fallthru
      _
    %v81 = vld [vmem:[#allocation2] sm:$0xff]
    %v82 = vld [vmem:[#allocation2 + $0x8] sm:$0xff]
    %v83 = vld [vmem:[#allocation2 + $0x10] sm:$0xff]
    %v84 = vld [vmem:[#allocation2 + $0x18] sm:$0xff]
    %v85 = vld [vmem:[#allocation2 + $0x20] sm:$0xff]
    %v86 = vld [vmem:[#allocation2 + $0x28] sm:$0xff]
    %v87 = vld [vmem:[#allocation2 + $0x30] sm:$0xff]
    %v88 = vld [vmem:[#allocation2 + $0x38] sm:$0xff]
    %v89 = vld [vmem:[#allocation2 + $0x40] sm:$0xff]
    %v90 = vld [vmem:[#allocation2 + $0x48] sm:$0xff]
    %v91 = vld [vmem:[#allocation2 + $0x50] sm:$0xff]
    %v92 = vld [vmem:[#allocation2 + $0x58] sm:$0xff]
    %v93 = vld [vmem:[#allocation2 + $0x60] sm:$0xff]
    %v94 = vld [vmem:[#allocation2 + $0x68] sm:$0xff]
    %v95 = vld [vmem:[#allocation2 + $0x70] sm:$0xff]
    %v96 = vld [vmem:[#allocation2 + $0x78] sm:$0xff]
    %v97 = vld [vmem:[#allocation2 + $0x80] sm:$0xff]
    %v98 = vld [vmem:[#allocation2 + $0x88] sm:$0xff]
    %v99 = vld [vmem:[#allocation2 + $0x90] sm:$0xff]
    %v100 = vld [vmem:[#allocation2 + $0x98] sm:$0xff]
    %v101 = vld [vmem:[#allocation2 + $0xa0] sm:$0xff]
    %v102 = vld [vmem:[#allocation2 + $0xa8] sm:$0xff]
    %v103 = vld [vmem:[#allocation2 + $0xb0] sm:$0xff]
    %v104 = vld [vmem:[#allocation2 + $0xb8] sm:$0xff]
    %v105 = vld [vmem:[#allocation2 + $0xc0] sm:$0xff]
    %v106 = vld [vmem:[#allocation2 + $0xc8] sm:$0xff]
    %v107 = vld [vmem:[#allocation2 + $0xd0] sm:$0xff]
    %v108 = vld [vmem:[#allocation2 + $0xd8] sm:$0xff]
    %v109 = vld [vmem:[#allocation4] sm:$0xff]
    %v110 = vld [vmem:[#allocation4 + $0x8] sm:$0xff]
    %v111 = vld [vmem:[#allocation4 + $0x10] sm:$0xff]
    %v112 = vld [vmem:[#allocation4 + $0x18] sm:$0xff]
    %v113 = vld [vmem:[#allocation4 + $0x20] sm:$0xff]
    %v114 = vld [vmem:[#allocation4 + $0x28] sm:$0xff]
    %v115 = vld [vmem:[#allocation4 + $0x30] sm:$0xff]
    %v116 = vld [vmem:[#allocation4 + $0x38] sm:$0xff]
    %v117 = vld [vmem:[#allocation4 + $0x40] sm:$0xff]
    %v118 = vld [vmem:[#allocation4 + $0x48] sm:$0xff]
    %v119 = vld [vmem:[#allocation4 + $0x50] sm:$0xff]
    %v120 = vld [vmem:[#allocation4 + $0x58] sm:$0xff]
    %v121 = vld [vmem:[#allocation4 + $0x60] sm:$0xff]
    %v122 = vld [vmem:[#allocation4 + $0x68] sm:$0xff]
    %v123 = vld [vmem:[#allocation4 + $0x70] sm:$0xff]
    %v124 = vld [vmem:[#allocation4 + $0x78] sm:$0xff]
    %v125 = vld [vmem:[#allocation4 + $0x80] sm:$0xff]
    %v126 = vld [vmem:[#allocation4 + $0x88] sm:$0xff]
    %v127 = vld [vmem:[#allocation4 + $0x90] sm:$0xff]
    %v128 = vld [vmem:[#allocation4 + $0x98] sm:$0xff]
    %v129 = vld [vmem:[#allocation4 + $0xa0] sm:$0xff]
    %v130 = vld [vmem:[#allocation4 + $0xa8] sm:$0xff]
    %v131 = vld [vmem:[#allocation4 + $0xb0] sm:$0xff]
    %v132 = vld [vmem:[#allocation4 + $0xb8] sm:$0xff]
    %v133 = vld [vmem:[#allocation4 + $0xc0] sm:$0xff]
    %v134 = vld [vmem:[#allocation4 + $0xc8] sm:$0xff]
    %v135 = vld [vmem:[#allocation4 + $0xd0] sm:$0xff]
    %v136 = vld [vmem:[#allocation4 + $0xd8] sm:$0xff]
    %v137 = vld [vmem:[#allocation4 + $0xe0] sm:$0xff]
    %v138 = vld [vmem:[#allocation4 + $0xe8] sm:$0xff]
    %v139 = vld [vmem:[#allocation4 + $0xf0] sm:$0xff]
    %v140 = vld [vmem:[#allocation4 + $0xf8] sm:$0xff]
    %v141 = vld [vmem:[#allocation4 + $0x100] sm:$0xff]
    %v142 = vld [vmem:[#allocation4 + $0x108] sm:$0xff]
    %v143 = vld [vmem:[#allocation4 + $0x110] sm:$0xff]
    %v144 = vld [vmem:[#allocation4 + $0x118] sm:$0xff]
    %v145 = vld [vmem:[#allocation4 + $0x120] sm:$0xff]
    %v146 = vld [vmem:[#allocation4 + $0x128] sm:$0xff]
    %v147 = vld [vmem:[#allocation4 + $0x130] sm:$0xff]
    %v148 = vld [vmem:[#allocation4 + $0x138] sm:$0xff]
    %v149 = vld [vmem:[#allocation4 + $0x140] sm:$0xff]
    %v150 = vld [vmem:[#allocation4 + $0x148] sm:$0xff]
    %v151 = vld [vmem:[#allocation4 + $0x150] sm:$0xff]
    %v152 = vld [vmem:[#allocation4 + $0x158] sm:$0xff]
    %v153 = vld [vmem:[#allocation4 + $0x160] sm:$0xff]
    %v154 = vld [vmem:[#allocation4 + $0x168] sm:$0xff]
    %v155 = vld [vmem:[#allocation4 + $0x170] sm:$0xff]
    %v156 = vld [vmem:[#allocation4 + $0x178] sm:$0xff]
    %v157 = vld [vmem:[#allocation4 + $0x180] sm:$0xff]
    %v158 = vld [vmem:[#allocation4 + $0x188] sm:$0xff]
    %v159 = vld [vmem:[#allocation4 + $0x190] sm:$0xff]
    %v160 = vld [vmem:[#allocation4 + $0x198] sm:$0xff]
    %v161 = vld [vmem:[#allocation4 + $0x1a0] sm:$0xff]
    %v162 = vld [vmem:[#allocation4 + $0x1a8] sm:$0xff]
    %v163 = vld [vmem:[#allocation4 + $0x1b0] sm:$0xff]
    %v164 = vld [vmem:[#allocation4 + $0x1b8] sm:$0xff]
    %v165 = vld [vmem:[#allocation4 + $0x1c0] sm:$0xff]
    %v166 = vld [vmem:[#allocation4 + $0x1c8] sm:$0xff]
    %v167 = vld [vmem:[#allocation4 + $0x1d0] sm:$0xff]
    %v168 = vld [vmem:[#allocation4 + $0x1d8] sm:$0xff]
    %v169 = vld [vmem:[#allocation4 + $0x1e0] sm:$0xff]
    %v170 = vld [vmem:[#allocation4 + $0x1e8] sm:$0xff]
    %v171 = vld [vmem:[#allocation4 + $0x1f0] sm:$0xff]
    %v172 = vld [vmem:[#allocation4 + $0x1f8] sm:$0xff]
    %v173 = vld [vmem:[#allocation4 + $0x200] sm:$0xff]
    %v174 = vld [vmem:[#allocation4 + $0x208] sm:$0xff]
    %v175 = vld [vmem:[#allocation4 + $0x210] sm:$0xff]
    %v176 = vld [vmem:[#allocation4 + $0x218] sm:$0xff]
    %v177 = vld [vmem:[#allocation4 + $0x220] sm:$0xff]
    %v178 = vld [vmem:[#allocation4 + $0x228] sm:$0xff]
    %v179 = vld [vmem:[#allocation4 + $0x230] sm:$0xff]
    %v180 = vld [vmem:[#allocation4 + $0x238] sm:$0xff]
    %v181 = vld [vmem:[#allocation4 + $0x240] sm:$0xff]
    %v182 = vld [vmem:[#allocation4 + $0x248] sm:$0xff]
    %v183 = vld [vmem:[#allocation4 + $0x250] sm:$0xff]
    %v184 = vld [vmem:[#allocation4 + $0x258] sm:$0xff]
    %v185 = vld [vmem:[#allocation4 + $0x260] sm:$0xff]
    %v186 = vld [vmem:[#allocation4 + $0x268] sm:$0xff]
    %v187 = vld [vmem:[#allocation4 + $0x270] sm:$0xff]
    %v188 = vld [vmem:[#allocation4 + $0x278] sm:$0xff]
    %v189 = vld [vmem:[#allocation4 + $0x280] sm:$0xff]
    %v190 = vld [vmem:[#allocation4 + $0x288] sm:$0xff]
    %v191 = vld [vmem:[#allocation4 + $0x290] sm:$0xff]
    %v192 = vld [vmem:[#allocation4 + $0x298] sm:$0xff]
    %v193 = vld [vmem:[#allocation4 + $0x2a0] sm:$0xff]
    %v194 = vld [vmem:[#allocation4 + $0x2a8] sm:$0xff]
    %v195 = vld [vmem:[#allocation4 + $0x2b0] sm:$0xff]
    %v196 = vld [vmem:[#allocation4 + $0x2b8] sm:$0xff]
    %v197 = vld [vmem:[#allocation4 + $0x2c0] sm:$0xff]
    %v198 = vld [vmem:[#allocation4 + $0x2c8] sm:$0xff]
    %v199 = vld [vmem:[#allocation4 + $0x2d0] sm:$0xff]
    %v200 = vld [vmem:[#allocation4 + $0x2d8] sm:$0xff]
    %v201 = vld [vmem:[#allocation4 + $0x2e0] sm:$0xff]
    %v202 = vld [vmem:[#allocation4 + $0x2e8] sm:$0xff]
    %v203 = vld [vmem:[#allocation4 + $0x2f0] sm:$0xff]
    %v204 = vld [vmem:[#allocation4 + $0x2f8] sm:$0xff]
    %v205 = vld [vmem:[#allocation4 + $0x300] sm:$0xff]
    %v206 = vld [vmem:[#allocation4 + $0x308] sm:$0xff]
    %v207 = vld [vmem:[#allocation4 + $0x310] sm:$0xff]
    %v208 = vld [vmem:[#allocation4 + $0x318] sm:$0xff]
    %v209 = vld [vmem:[#allocation4 + $0x320] sm:$0xff]
    %v210 = vld [vmem:[#allocation4 + $0x328] sm:$0xff]
    %v211 = vld [vmem:[#allocation4 + $0x330] sm:$0xff]
    %v212 = vld [vmem:[#allocation4 + $0x338] sm:$0xff]
    %v213 = vld [vmem:[#allocation4 + $0x340] sm:$0xff]
    %v214 = vld [vmem:[#allocation4 + $0x348] sm:$0xff]
    %v215 = vld [vmem:[#allocation4 + $0x350] sm:$0xff]
    %v216 = vld [vmem:[#allocation4 + $0x358] sm:$0xff]
    %v217 = vld [vmem:[#allocation4 + $0x360] sm:$0xff]
    %v218 = vld [vmem:[#allocation4 + $0x368] sm:$0xff]
    %v219 = vld [vmem:[#allocation4 + $0x370] sm:$0xff]
    %v220 = vld [vmem:[#allocation4 + $0x378] sm:$0xff]
    %v221 = vld [vmem:[#allocation4 + $0x380] sm:$0xff]
    %v222 = vld [vmem:[#allocation4 + $0x388] sm:$0xff]
    %v223 = vld [vmem:[#allocation4 + $0x390] sm:$0xff]
    %v224 = vld [vmem:[#allocation4 + $0x398] sm:$0xff]
    %v225 = vld [vmem:[#allocation4 + $0x3a0] sm:$0xff]
    %v226 = vld [vmem:[#allocation4 + $0x3a8] sm:$0xff]
    %v227 = vld [vmem:[#allocation4 + $0x3b0] sm:$0xff]
    %v228 = vld [vmem:[#allocation4 + $0x3b8] sm:$0xff]
    %v229 = vld [vmem:[#allocation4 + $0x3c0] sm:$0xff]
    %v230 = vld [vmem:[#allocation4 + $0x3c8] sm:$0xff]
    %v231 = vld [vmem:[#allocation4 + $0x3d0] sm:$0xff]
    %v232 = vld [vmem:[#allocation4 + $0x3d8] sm:$0xff]
    %v233 = vld [vmem:[#allocation4 + $0x3e0] sm:$0xff]
    %v234 = vld [vmem:[#allocation4 + $0x3e8] sm:$0xff]
    %v235 = vld [vmem:[#allocation4 + $0x3f0] sm:$0xff]
    %v236 = vld [vmem:[#allocation4 + $0x3f8] sm:$0xff]
    %v237 = vld [vmem:[#allocation4 + $0x400] sm:$0xff]
    %v238 = vld [vmem:[#allocation4 + $0x408] sm:$0xff]
    %v239 = vld [vmem:[#allocation4 + $0x410] sm:$0xff]
    %v240 = vld [vmem:[#allocation4 + $0x418] sm:$0xff]
    %v241 = vld [vmem:[#allocation4 + $0x420] sm:$0xff]
    %v242 = vld [vmem:[#allocation4 + $0x428] sm:$0xff]
    %v243 = vld [vmem:[#allocation4 + $0x430] sm:$0xff]
    %v244 = vld [vmem:[#allocation4 + $0x438] sm:$0xff]
    %v245 = vld [vmem:[#allocation4 + $0x440] sm:$0xff]
    %v246 = vld [vmem:[#allocation4 + $0x448] sm:$0xff]
    %v247 = vld [vmem:[#allocation4 + $0x450] sm:$0xff]
    %v248 = vld [vmem:[#allocation4 + $0x458] sm:$0xff]
    %v249 = vld [vmem:[#allocation4 + $0x460] sm:$0xff]
    %v250 = vld [vmem:[#allocation4 + $0x468] sm:$0xff]
    %v251 = vld [vmem:[#allocation4 + $0x470] sm:$0xff]
    %v252 = vld [vmem:[#allocation4 + $0x478] sm:$0xff]
    %v253 = vld [vmem:[#allocation4 + $0x480] sm:$0xff]
    %v254 = vld [vmem:[#allocation4 + $0x488] sm:$0xff]
    %v255 = vld [vmem:[#allocation4 + $0x490] sm:$0xff]
    %v256 = vld [vmem:[#allocation4 + $0x498] sm:$0xff]
    %v257 = vld [vmem:[#allocation4 + $0x4a0] sm:$0xff]
    %v258 = vld [vmem:[#allocation4 + $0x4a8] sm:$0xff]
    %v259 = vld [vmem:[#allocation4 + $0x4b0] sm:$0xff]
    %v260 = vld [vmem:[#allocation4 + $0x4b8] sm:$0xff]
    %v261 = vld [vmem:[#allocation4 + $0x4c0] sm:$0xff]
    %v262 = vld [vmem:[#allocation4 + $0x4c8] sm:$0xff]
    %v263 = vld [vmem:[#allocation4 + $0x4d0] sm:$0xff]
    %v264 = vld [vmem:[#allocation4 + $0x4d8] sm:$0xff]
    %v265 = vld [vmem:[#allocation4 + $0x4e0] sm:$0xff]
    %v266 = vld [vmem:[#allocation4 + $0x4e8] sm:$0xff]
    %v267 = vld [vmem:[#allocation4 + $0x4f0] sm:$0xff]
    %v268 = vld [vmem:[#allocation4 + $0x4f8] sm:$0xff]
    %v269 = vld [vmem:[#allocation4 + $0x500] sm:$0xff]
    %v270 = vld [vmem:[#allocation4 + $0x508] sm:$0xff]
    %v271 = vld [vmem:[#allocation4 + $0x510] sm:$0xff]
    %v272 = vld [vmem:[#allocation4 + $0x518] sm:$0xff]
    %v273 = vld [vmem:[#allocation4 + $0x520] sm:$0xff]
    %v274 = vld [vmem:[#allocation4 + $0x528] sm:$0xff]
    %v275 = vld [vmem:[#allocation4 + $0x530] sm:$0xff]
    %v276 = vld [vmem:[#allocation4 + $0x538] sm:$0xff]
    %v277 = vld [vmem:[#allocation4 + $0x540] sm:$0xff]
    %v278 = vld [vmem:[#allocation4 + $0x548] sm:$0xff]
    %v279 = vld [vmem:[#allocation4 + $0x550] sm:$0xff]
    %v280 = vld [vmem:[#allocation4 + $0x558] sm:$0xff]
    %v281 = vld [vmem:[#allocation4 + $0x560] sm:$0xff]
    %v282 = vld [vmem:[#allocation4 + $0x568] sm:$0xff]
    %v283 = vld [vmem:[#allocation4 + $0x570] sm:$0xff]
    %v284 = vld [vmem:[#allocation4 + $0x578] sm:$0xff]
    %v285 = vld [vmem:[#allocation4 + $0x580] sm:$0xff]
    %v286 = vld [vmem:[#allocation4 + $0x588] sm:$0xff]
    %v287 = vld [vmem:[#allocation4 + $0x590] sm:$0xff]
    %v288 = vld [vmem:[#allocation4 + $0x598] sm:$0xff]
    %v289 = vld [vmem:[#allocation4 + $0x5a0] sm:$0xff]
    %v290 = vld [vmem:[#allocation4 + $0x5a8] sm:$0xff]
    %v291 = vld [vmem:[#allocation4 + $0x5b0] sm:$0xff]
    %v292 = vld [vmem:[#allocation4 + $0x5b8] sm:$0xff]
    %v293 = vld [vmem:[#allocation4 + $0x5c0] sm:$0xff]
    %v294 = vld [vmem:[#allocation4 + $0x5c8] sm:$0xff]
    %v295 = vld [vmem:[#allocation4 + $0x5d0] sm:$0xff]
    %v296 = vld [vmem:[#allocation4 + $0x5d8] sm:$0xff]
    %v297 = vld [vmem:[#allocation4 + $0x5e0] sm:$0xff]
    %v298 = vld [vmem:[#allocation4 + $0x5e8] sm:$0xff]
    %v299 = vld [vmem:[#allocation4 + $0x5f0] sm:$0xff]
    %v300 = vld [vmem:[#allocation4 + $0x5f8] sm:$0xff]
    %v301 = vld [vmem:[#allocation4 + $0x600] sm:$0xff]
    %v302 = vld [vmem:[#allocation4 + $0x608] sm:$0xff]
    %v303 = vld [vmem:[#allocation4 + $0x610] sm:$0xff]
    %v304 = vld [vmem:[#allocation4 + $0x618] sm:$0xff]
    %v305 = vld [vmem:[%s2] sm:$0x3]
    %v307 = vlaneseq
    %v308 = vshrl.u32 %v307, 7
    %v309 = vsub.s32 0, %v308
    %v310 = vrot.slane %v305, %v309
    %v311 = vlaneseq
    %v312 = vshrl.u32 %v311, 7
    %v313 = vsub.s32 1, %v312
    %v314 = vrot.slane %v305, %v313
    %vm317 = vcmask 130048
    %v319 = vsel %vm317, %v87, 0
    %v322 = vsel %vm317, %v94, 0
    %v325 = vsel %vm317, %v101, 0
    %v328 = vsel %vm317, %v108, 0
    %330 = vmatprep.subr.mxu0 %v110
    %331 = vmatpush1.msra.mxu0 %v109
    %332 = vmatprep.subr.mxu0 %v112
    %333 = vmatpush1.msra.mxu0 %v111
    %334 = vmatprep.subr.mxu0 %v114
    %335 = vmatpush1.msra.mxu0 %v113
    %336 = vmatprep.subr.mxu0 %v116
    %337 = vmatpush1.msra.mxu0 %v115
    %338 = vmatprep.subr.mxu0 %v118
    %339 = vmatpush1.msra.mxu0 %v117
    %340 = vmatprep.subr.mxu0 %v120
    %341 = vmatpush1.msra.mxu0 %v119
    %342 = vmatprep.subr.mxu0 %v122
    %343 = vmatpush1.msra.mxu0 %v121
    %344 = vmatprep.subr.mxu0 %v124
    %345 = vmatpush1.msra.mxu0 %v123
    %346 = vmatprep.subr.mxu0 %v126
    %347 = vmatpush1.msra.mxu0 %v125
    %348 = vmatprep.subr.mxu0 %v128
    %349 = vmatpush1.msra.mxu0 %v127
    %350 = vmatprep.subr.mxu0 %v130
    %351 = vmatpush1.msra.mxu0 %v129
    %352 = vmatprep.subr.mxu0 %v132
    %353 = vmatpush1.msra.mxu0 %v131
    %354 = vmatprep.subr.mxu0 %v134
    %355 = vmatpush1.msra.mxu0 %v133
    %356 = vmatprep.subr.mxu0 %v136
    %357 = vmatpush1.msra.mxu0 %v135
    %358 = vmatprep.subr.mxu0 %v138
    %359 = vmatpush1.msra.mxu0 %v137
    %360 = vmatprep.subr.mxu0 %v140
    %361 = vmatpush1.msra.mxu0 %v139
    %362 = vmatprep.subr.mxu0 %v142
    %363 = vmatpush1.msra.mxu0 %v141
    %364 = vmatprep.subr.mxu0 %v144
    %365 = vmatpush1.msra.mxu0 %v143
    %366 = vmatprep.subr.mxu0 %v146
    %367 = vmatpush1.msra.mxu0 %v145
    %368 = vmatprep.subr.mxu0 %v148
    %369 = vmatpush1.msra.mxu0 %v147
    %370 = vmatprep.subr.mxu0 %v150
    %371 = vmatpush1.msra.mxu0 %v149
    %372 = vmatprep.subr.mxu0 %v152
    %373 = vmatpush1.msra.mxu0 %v151
    %374 = vmatprep.subr.mxu0 %v154
    %375 = vmatpush1.msra.mxu0 %v153
    %376 = vmatprep.subr.mxu0 %v156
    %377 = vmatpush1.msra.mxu0 %v155
    %378 = vmatprep.subr.mxu0 %v158
    %379 = vmatpush1.msra.mxu0 %v157
    %380 = vmatprep.subr.mxu0 %v160
    %381 = vmatpush1.msra.mxu0 %v159
    %382 = vmatprep.subr.mxu0 %v162
    %383 = vmatpush1.msra.mxu0 %v161
    %384 = vmatprep.subr.mxu0 %v164
    %385 = vmatpush1.msra.mxu0 %v163
    %386 = vmatprep.subr.mxu0 %v166
    %387 = vmatpush1.msra.mxu0 %v165
    %388 = vmatprep.subr.mxu0 %v168
    %389 = vmatpush1.msra.mxu0 %v167
    %390 = vmatprep.subr.mxu0 %v170
    %391 = vmatpush1.msra.mxu0 %v169
    %392 = vmatprep.subr.mxu0 %v172
    %393 = vmatpush1.msra.mxu0 %v171
    %394 = vmatprep.mubr.f32.mxu0 %v82
    %395 = vmatmul.mubr.f32.gmra.mrb[0].mxu0 %v81
    %v396 = vpop.f32.mrb[0].mxu0
    %v397 = vadd.f32 %v310, %v396
    %v398 = vpop.f32.mrb[0].mxu0
    %v399 = vadd.f32 %v314, %v398
    %400 = vmatprep.mubr.f32.mxu0 %v89
    %401 = vmatmul.mubr.f32.gmra.mrb[0].mxu0 %v88
    %v402 = vpop.f32.mrb[0].mxu0
    %v403 = vadd.f32 %v310, %v402
    %v404 = vpop.f32.mrb[0].mxu0
    %v405 = vadd.f32 %v314, %v404
    %406 = vmatprep.mubr.f32.mxu0 %v96
    %407 = vmatmul.mubr.f32.gmra.mrb[0].mxu0 %v95
    %v408 = vpop.f32.mrb[0].mxu0
    %v409 = vadd.f32 %v310, %v408
    %v410 = vpop.f32.mrb[0].mxu0
    %v411 = vadd.f32 %v314, %v410
    %412 = vmatprep.mubr.f32.mxu0 %v103
    %413 = vmatmul.mubr.f32.gmra.mrb[0].mxu0 %v102
    %v414 = vpop.f32.mrb[0].mxu0
    %v415 = vadd.f32 %v310, %v414
    %v416 = vpop.f32.mrb[0].mxu0
    %v417 = vadd.f32 %v314, %v416
    %418 = vdwg.mxu0
    %419 = vmatprep.subr.mxu0 %v174
    %420 = vmatpush1.msra.mxu0 %v173
    %421 = vmatprep.subr.mxu0 %v176
    %422 = vmatpush1.msra.mxu0 %v175
    %423 = vmatprep.subr.mxu0 %v178
    %424 = vmatpush1.msra.mxu0 %v177
    %425 = vmatprep.subr.mxu0 %v180
    %426 = vmatpush1.msra.mxu0 %v179
    %427 = vmatprep.subr.mxu0 %v182
    %428 = vmatpush1.msra.mxu0 %v181
    %429 = vmatprep.subr.mxu0 %v184
    %430 = vmatpush1.msra.mxu0 %v183
    %431 = vmatprep.subr.mxu0 %v186
    %432 = vmatpush1.msra.mxu0 %v185
    %433 = vmatprep.subr.mxu0 %v188
    %434 = vmatpush1.msra.mxu0 %v187
    %435 = vmatprep.subr.mxu0 %v190
    %436 = vmatpush1.msra.mxu0 %v189
    %437 = vmatprep.subr.mxu0 %v192
    %438 = vmatpush1.msra.mxu0 %v191
    %439 = vmatprep.subr.mxu0 %v194
    %440 = vmatpush1.msra.mxu0 %v193
    %441 = vmatprep.subr.mxu0 %v196
    %442 = vmatpush1.msra.mxu0 %v195
    %443 = vmatprep.subr.mxu0 %v198
    %444 = vmatpush1.msra.mxu0 %v197
    %445 = vmatprep.subr.mxu0 %v200
    %446 = vmatpush1.msra.mxu0 %v199
    %447 = vmatprep.subr.mxu0 %v202
    %448 = vmatpush1.msra.mxu0 %v201
    %449 = vmatprep.subr.mxu0 %v204
    %450 = vmatpush1.msra.mxu0 %v203
    %451 = vmatprep.subr.mxu0 %v206
    %452 = vmatpush1.msra.mxu0 %v205
    %453 = vmatprep.subr.mxu0 %v208
    %454 = vmatpush1.msra.mxu0 %v207
    %455 = vmatprep.subr.mxu0 %v210
    %456 = vmatpush1.msra.mxu0 %v209
    %457 = vmatprep.subr.mxu0 %v212
    %458 = vmatpush1.msra.mxu0 %v211
    %459 = vmatprep.subr.mxu0 %v214
    %460 = vmatpush1.msra.mxu0 %v213
    %461 = vmatprep.subr.mxu0 %v216
    %462 = vmatpush1.msra.mxu0 %v215
    %463 = vmatprep.subr.mxu0 %v218
    %464 = vmatpush1.msra.mxu0 %v217
    %465 = vmatprep.subr.mxu0 %v220
    %466 = vmatpush1.msra.mxu0 %v219
    %467 = vmatprep.subr.mxu0 %v222
    %468 = vmatpush1.msra.mxu0 %v221
    %469 = vmatprep.subr.mxu0 %v224
    %470 = vmatpush1.msra.mxu0 %v223
    %471 = vmatprep.subr.mxu0 %v226
    %472 = vmatpush1.msra.mxu0 %v225
    %473 = vmatprep.subr.mxu0 %v228
    %474 = vmatpush1.msra.mxu0 %v227
    %475 = vmatprep.subr.mxu0 %v230
    %476 = vmatpush1.msra.mxu0 %v229
    %477 = vmatprep.subr.mxu0 %v232
    %478 = vmatpush1.msra.mxu0 %v231
    %479 = vmatprep.subr.mxu0 %v234
    %480 = vmatpush1.msra.mxu0 %v233
    %481 = vmatprep.subr.mxu0 %v236
    %482 = vmatpush1.msra.mxu0 %v235
    %483 = vmatprep.mubr.f32.mxu0 %v84
    %484 = vmatmul.mubr.f32.gmra.mrb[0].mxu0 %v83
    %v485 = vpop.f32.mrb[0].mxu0
    %v486 = vadd.f32 %v397, %v485
    %v487 = vpop.f32.mrb[0].mxu0
    %v488 = vadd.f32 %v399, %v487
    %489 = vmatprep.mubr.f32.mxu0 %v91
    %490 = vmatmul.mubr.f32.gmra.mrb[0].mxu0 %v90
    %v491 = vpop.f32.mrb[0].mxu0
    %v492 = vadd.f32 %v403, %v491
    %v493 = vpop.f32.mrb[0].mxu0
    %v494 = vadd.f32 %v405, %v493
    %495 = vmatprep.mubr.f32.mxu0 %v98
    %496 = vmatmul.mubr.f32.gmra.mrb[0].mxu0 %v97
    %v497 = vpop.f32.mrb[0].mxu0
    %v498 = vadd.f32 %v409, %v497
    %v499 = vpop.f32.mrb[0].mxu0
    %v500 = vadd.f32 %v411, %v499
    %501 = vmatprep.mubr.f32.mxu0 %v105
    %502 = vmatmul.mubr.f32.gmra.mrb[0].mxu0 %v104
    %v503 = vpop.f32.mrb[0].mxu0
    %v504 = vadd.f32 %v415, %v503
    %v505 = vpop.f32.mrb[0].mxu0
    %v506 = vadd.f32 %v417, %v505
    %507 = vdwg.mxu0
    %508 = vmatprep.subr.mxu0 %v238
    %509 = vmatpush1.msra.mxu0 %v237
    %510 = vmatprep.subr.mxu0 %v240
    %511 = vmatpush1.msra.mxu0 %v239
    %512 = vmatprep.subr.mxu0 %v242
    %513 = vmatpush1.msra.mxu0 %v241
    %514 = vmatprep.subr.mxu0 %v244
    %515 = vmatpush1.msra.mxu0 %v243
    %516 = vmatprep.subr.mxu0 %v246
    %517 = vmatpush1.msra.mxu0 %v245
    %518 = vmatprep.subr.mxu0 %v248
    %519 = vmatpush1.msra.mxu0 %v247
    %520 = vmatprep.subr.mxu0 %v250
    %521 = vmatpush1.msra.mxu0 %v249
    %522 = vmatprep.subr.mxu0 %v252
    %523 = vmatpush1.msra.mxu0 %v251
    %524 = vmatprep.subr.mxu0 %v254
    %525 = vmatpush1.msra.mxu0 %v253
    %526 = vmatprep.subr.mxu0 %v256
    %527 = vmatpush1.msra.mxu0 %v255
    %528 = vmatprep.subr.mxu0 %v258
    %529 = vmatpush1.msra.mxu0 %v257
    %530 = vmatprep.subr.mxu0 %v260
    %531 = vmatpush1.msra.mxu0 %v259
    %532 = vmatprep.subr.mxu0 %v262
    %533 = vmatpush1.msra.mxu0 %v261
    %534 = vmatprep.subr.mxu0 %v264
    %535 = vmatpush1.msra.mxu0 %v263
    %536 = vmatprep.subr.mxu0 %v266
    %537 = vmatpush1.msra.mxu0 %v265
    %538 = vmatprep.subr.mxu0 %v268
    %539 = vmatpush1.msra.mxu0 %v267
    %540 = vmatprep.subr.mxu0 %v270
    %541 = vmatpush1.msra.mxu0 %v269
    %542 = vmatprep.subr.mxu0 %v272
    %543 = vmatpush1.msra.mxu0 %v271
    %544 = vmatprep.subr.mxu0 %v274
    %545 = vmatpush1.msra.mxu0 %v273
    %546 = vmatprep.subr.mxu0 %v276
    %547 = vmatpush1.msra.mxu0 %v275
    %548 = vmatprep.subr.mxu0 %v278
    %549 = vmatpush1.msra.mxu0 %v277
    %550 = vmatprep.subr.mxu0 %v280
    %551 = vmatpush1.msra.mxu0 %v279
    %552 = vmatprep.subr.mxu0 %v282
    %553 = vmatpush1.msra.mxu0 %v281
    %554 = vmatprep.subr.mxu0 %v284
    %555 = vmatpush1.msra.mxu0 %v283
    %556 = vmatprep.subr.mxu0 %v286
    %557 = vmatpush1.msra.mxu0 %v285
    %558 = vmatprep.subr.mxu0 %v288
    %559 = vmatpush1.msra.mxu0 %v287
    %560 = vmatprep.subr.mxu0 %v290
    %561 = vmatpush1.msra.mxu0 %v289
    %562 = vmatprep.subr.mxu0 %v292
    %563 = vmatpush1.msra.mxu0 %v291
    %564 = vmatprep.subr.mxu0 %v294
    %565 = vmatpush1.msra.mxu0 %v293
    %566 = vmatprep.subr.mxu0 %v296
    %567 = vmatpush1.msra.mxu0 %v295
    %568 = vmatprep.subr.mxu0 %v298
    %569 = vmatpush1.msra.mxu0 %v297
    %570 = vmatprep.subr.mxu0 %v300
    %571 = vmatpush1.msra.mxu0 %v299
    %572 = vmatprep.mubr.f32.mxu0 %v86
    %573 = vmatmul.mubr.f32.gmra.mrb[0].mxu0 %v85
    %v574 = vpop.f32.mrb[0].mxu0
    %v575 = vadd.f32 %v486, %v574
    %v576 = vpop.f32.mrb[0].mxu0
    %v577 = vadd.f32 %v488, %v576
    %578 = vmatprep.mubr.f32.mxu0 %v93
    %579 = vmatmul.mubr.f32.gmra.mrb[0].mxu0 %v92
    %v580 = vpop.f32.mrb[0].mxu0
    %v581 = vadd.f32 %v492, %v580
    %v582 = vpop.f32.mrb[0].mxu0
    %v583 = vadd.f32 %v494, %v582
    %584 = vmatprep.mubr.f32.mxu0 %v100
    %585 = vmatmul.mubr.f32.gmra.mrb[0].mxu0 %v99
    %v586 = vpop.f32.mrb[0].mxu0
    %v587 = vadd.f32 %v498, %v586
    %v588 = vpop.f32.mrb[0].mxu0
    %v589 = vadd.f32 %v500, %v588
    %590 = vmatprep.mubr.f32.mxu0 %v107
    %591 = vmatmul.mubr.f32.gmra.mrb[0].mxu0 %v106
    %v592 = vpop.f32.mrb[0].mxu0
    %v593 = vadd.f32 %v504, %v592
    %v594 = vpop.f32.mrb[0].mxu0
    %v595 = vadd.f32 %v506, %v594
    %596 = vdwg.mxu0
    %597 = vmatprep.subr.mxu0 %v302
    %598 = vmatpush1.msra.mxu0 %v301
    %599 = vmatprep.subr.mxu0 %v304
    %600 = vmatpush1.msra.mxu0 %v303
    %601 = vmatprep.subr.mxu0 0.0
    %602 = vmatpush1.msra.mxu0 0.0
    %603 = vmatprep.subr.mxu0 0.0
    %604 = vmatpush1.msra.mxu0 0.0
    %605 = vmatprep.subr.mxu0 0.0
    %606 = vmatpush1.msra.mxu0 0.0
    %607 = vmatprep.subr.mxu0 0.0
    %608 = vmatpush1.msra.mxu0 0.0
    %609 = vmatprep.subr.mxu0 0.0
    %610 = vmatpush1.msra.mxu0 0.0
    %611 = vmatprep.subr.mxu0 0.0
    %612 = vmatpush1.msra.mxu0 0.0
    %613 = vmatprep.subr.mxu0 0.0
    %614 = vmatpush1.msra.mxu0 0.0
    %615 = vmatprep.subr.mxu0 0.0
    %616 = vmatpush1.msra.mxu0 0.0
    %617 = vmatprep.subr.mxu0 0.0
    %618 = vmatpush1.msra.mxu0 0.0
    %619 = vmatprep.subr.mxu0 0.0
    %620 = vmatpush1.msra.mxu0 0.0
    %621 = vmatprep.subr.mxu0 0.0
    %622 = vmatpush1.msra.mxu0 0.0
    %623 = vmatprep.subr.mxu0 0.0
    %624 = vmatpush1.msra.mxu0 0.0
    %625 = vmatprep.subr.mxu0 0.0
    %626 = vmatpush1.msra.mxu0 0.0
    %627 = vmatprep.subr.mxu0 0.0
    %628 = vmatpush1.msra.mxu0 0.0
    %629 = vmatprep.subr.mxu0 0.0
    %630 = vmatpush1.msra.mxu0 0.0
    %631 = vmatprep.subr.mxu0 0.0
    %632 = vmatpush1.msra.mxu0 0.0
    %633 = vmatprep.subr.mxu0 0.0
    %634 = vmatpush1.msra.mxu0 0.0
    %635 = vmatprep.subr.mxu0 0.0
    %636 = vmatpush1.msra.mxu0 0.0
    %637 = vmatprep.subr.mxu0 0.0
    %638 = vmatpush1.msra.mxu0 0.0
    %639 = vmatprep.subr.mxu0 0.0
    %640 = vmatpush1.msra.mxu0 0.0
    %641 = vmatprep.subr.mxu0 0.0
    %642 = vmatpush1.msra.mxu0 0.0
    %643 = vmatprep.subr.mxu0 0.0
    %644 = vmatpush1.msra.mxu0 0.0
    %645 = vmatprep.subr.mxu0 0.0
    %646 = vmatpush1.msra.mxu0 0.0
    %647 = vmatprep.subr.mxu0 0.0
    %648 = vmatpush1.msra.mxu0 0.0
    %649 = vmatprep.subr.mxu0 0.0
    %650 = vmatpush1.msra.mxu0 0.0
    %651 = vmatprep.subr.mxu0 0.0
    %652 = vmatpush1.msra.mxu0 0.0
    %653 = vmatprep.subr.mxu0 0.0
    %654 = vmatpush1.msra.mxu0 0.0
    %655 = vmatprep.subr.mxu0 0.0
    %656 = vmatpush1.msra.mxu0 0.0
    %657 = vmatprep.subr.mxu0 0.0
    %658 = vmatpush1.msra.mxu0 0.0
    %659 = vmatprep.subr.mxu0 0.0
    %660 = vmatpush1.msra.mxu0 0.0
    %661 = vmatprep.mubr.f32.mxu0 0.0
    %662 = vmatmul.mubr.f32.gmra.mrb[0].mxu0 %v319
    %v663 = vpop.f32.mrb[0].mxu0
    %v664 = vadd.f32 %v575, %v663
    %v665 = vpop.f32.mrb[0].mxu0
    %v666 = vadd.f32 %v577, %v665
    %667 = vmatprep.mubr.f32.mxu0 0.0
    %668 = vmatmul.mubr.f32.gmra.mrb[0].mxu0 %v322
    %v669 = vpop.f32.mrb[0].mxu0
    %v670 = vadd.f32 %v581, %v669
    %v671 = vpop.f32.mrb[0].mxu0
    %v672 = vadd.f32 %v583, %v671
    %673 = vmatprep.mubr.f32.mxu0 0.0
    %674 = vmatmul.mubr.f32.gmra.mrb[0].mxu0 %v325
    %v675 = vpop.f32.mrb[0].mxu0
    %v676 = vadd.f32 %v587, %v675
    %v677 = vpop.f32.mrb[0].mxu0
    %v678 = vadd.f32 %v589, %v677
    %679 = vmatprep.mubr.f32.mxu0 0.0
    %680 = vmatmul.mubr.f32.gmra.mrb[0].mxu0 %v328
    %v681 = vpop.f32.mrb[0].mxu0
    %v682 = vadd.f32 %v593, %v681
    %v683 = vpop.f32.mrb[0].mxu0
    %v684 = vadd.f32 %v595, %v683
    %685 = vdwg.mxu0
    %v686 = vmax.f32 %v664, 0.0
    %v687 = vmax.f32 %v666, 0.0
    %v688 = vmax.f32 %v670, 0.0
    %v689 = vmax.f32 %v672, 0.0
    %v690 = vmax.f32 %v676, 0.0
    %v691 = vmax.f32 %v678, 0.0
    %v692 = vmax.f32 %v682, 0.0
    %v693 = vmax.f32 %v684, 0.0
    %v694 = vld [vmem:[#allocation6] sm:$0xff]
    %v695 = vld [vmem:[#allocation6 + $0x8] sm:$0xff]
    %v696 = vld [vmem:[#allocation6 + $0x10] sm:$0xff]
    %v697 = vld [vmem:[#allocation6 + $0x18] sm:$0xff]
    %v698 = vld [vmem:[#allocation6 + $0x20] sm:$0xff]
    %v699 = vld [vmem:[#allocation6 + $0x28] sm:$0xff]
    %v700 = vld [vmem:[#allocation6 + $0x30] sm:$0xff]
    %v701 = vld [vmem:[#allocation6 + $0x38] sm:$0xff]
    %v702 = vld [vmem:[#allocation6 + $0x40] sm:$0xff]
    %v703 = vld [vmem:[#allocation6 + $0x48] sm:$0xff]
    %v704 = vld [vmem:[#allocation6 + $0x50] sm:$0xff]
    %v705 = vld [vmem:[#allocation6 + $0x58] sm:$0xff]
    %v706 = vld [vmem:[#allocation6 + $0x60] sm:$0xff]
    %v707 = vld [vmem:[#allocation6 + $0x68] sm:$0xff]
    %v708 = vld [vmem:[#allocation6 + $0x70] sm:$0xff]
    %v709 = vld [vmem:[#allocation6 + $0x78] sm:$0xff]
    %v710 = vld [vmem:[#allocation6 + $0x80] sm:$0xff]
    %v711 = vld [vmem:[#allocation6 + $0x88] sm:$0xff]
    %v712 = vld [vmem:[#allocation6 + $0x90] sm:$0xff]
    %v713 = vld [vmem:[#allocation6 + $0x98] sm:$0xff]
    %v714 = vld [vmem:[#allocation6 + $0xa0] sm:$0xff]
    %v715 = vld [vmem:[#allocation6 + $0xa8] sm:$0xff]
    %v716 = vld [vmem:[#allocation6 + $0xb0] sm:$0xff]
    %v717 = vld [vmem:[#allocation6 + $0xb8] sm:$0xff]
    %v718 = vld [vmem:[#allocation6 + $0xc0] sm:$0xff]
    %v719 = vld [vmem:[#allocation6 + $0xc8] sm:$0xff]
    %v720 = vld [vmem:[#allocation6 + $0xd0] sm:$0xff]
    %v721 = vld [vmem:[#allocation6 + $0xd8] sm:$0xff]
    %v722 = vld [vmem:[#allocation6 + $0xe0] sm:$0xff]
    %v723 = vld [vmem:[#allocation6 + $0xe8] sm:$0xff]
    %v724 = vld [vmem:[#allocation6 + $0xf0] sm:$0xff]
    %v725 = vld [vmem:[#allocation6 + $0xf8] sm:$0xff]
    %v726 = vld [vmem:[#allocation6 + $0x100] sm:$0xff]
    %v727 = vld [vmem:[#allocation6 + $0x108] sm:$0xff]
    %v728 = vld [vmem:[#allocation6 + $0x110] sm:$0xff]
    %v729 = vld [vmem:[#allocation6 + $0x118] sm:$0xff]
    %v730 = vld [vmem:[#allocation6 + $0x120] sm:$0xff]
    %v731 = vld [vmem:[#allocation6 + $0x128] sm:$0xff]
    %v732 = vld [vmem:[#allocation6 + $0x130] sm:$0xff]
    %v733 = vld [vmem:[#allocation6 + $0x138] sm:$0xff]
    %v734 = vld [vmem:[#allocation6 + $0x140] sm:$0xff]
    %v735 = vld [vmem:[#allocation6 + $0x148] sm:$0xff]
    %v736 = vld [vmem:[#allocation6 + $0x150] sm:$0xff]
    %v737 = vld [vmem:[#allocation6 + $0x158] sm:$0xff]
    %v738 = vld [vmem:[#allocation6 + $0x160] sm:$0xff]
    %v739 = vld [vmem:[#allocation6 + $0x168] sm:$0xff]
    %v740 = vld [vmem:[#allocation6 + $0x170] sm:$0xff]
    %v741 = vld [vmem:[#allocation6 + $0x178] sm:$0xff]
    %v742 = vld [vmem:[#allocation6 + $0x180] sm:$0xff]
    %v743 = vld [vmem:[#allocation6 + $0x188] sm:$0xff]
    %v744 = vld [vmem:[#allocation6 + $0x190] sm:$0xff]
    %v745 = vld [vmem:[#allocation6 + $0x198] sm:$0xff]
    %v746 = vld [vmem:[#allocation6 + $0x1a0] sm:$0xff]
    %v747 = vld [vmem:[#allocation6 + $0x1a8] sm:$0xff]
    %v748 = vld [vmem:[#allocation6 + $0x1b0] sm:$0xff]
    %v749 = vld [vmem:[#allocation6 + $0x1b8] sm:$0xff]
    %v750 = vld [vmem:[#allocation6 + $0x1c0] sm:$0xff]
    %v751 = vld [vmem:[#allocation6 + $0x1c8] sm:$0xff]
    %v752 = vld [vmem:[#allocation6 + $0x1d0] sm:$0xff]
    %v753 = vld [vmem:[#allocation6 + $0x1d8] sm:$0xff]
    %v754 = vld [vmem:[#allocation6 + $0x1e0] sm:$0xff]
    %v755 = vld [vmem:[#allocation6 + $0x1e8] sm:$0xff]
    %v756 = vld [vmem:[#allocation6 + $0x1f0] sm:$0xff]
    %v757 = vld [vmem:[#allocation6 + $0x1f8] sm:$0xff]
    %v758 = vld [vmem:[%s4] sm:$0x3]
    %v760 = vlaneseq
    %v761 = vshrl.u32 %v760, 7
    %v762 = vsub.s32 0, %v761
    %v763 = vrot.slane %v758, %v762
    %v764 = vlaneseq
    %v765 = vshrl.u32 %v764, 7
    %v766 = vsub.s32 1, %v765
    %v767 = vrot.slane %v758, %v766
    %770 = vmatprep.subr.mxu0 %v695
    %771 = vmatpush1.msra.mxu0 %v694
    %772 = vmatprep.subr.mxu0 %v697
    %773 = vmatpush1.msra.mxu0 %v696
    %774 = vmatprep.subr.mxu0 %v699
    %775 = vmatpush1.msra.mxu0 %v698
    %776 = vmatprep.subr.mxu0 %v701
    %777 = vmatpush1.msra.mxu0 %v700
    %778 = vmatprep.subr.mxu0 %v703
    %779 = vmatpush1.msra.mxu0 %v702
    %780 = vmatprep.subr.mxu0 %v705
    %781 = vmatpush1.msra.mxu0 %v704
    %782 = vmatprep.subr.mxu0 %v707
    %783 = vmatpush1.msra.mxu0 %v706
    %784 = vmatprep.subr.mxu0 %v709
    %785 = vmatpush1.msra.mxu0 %v708
    %786 = vmatprep.subr.mxu0 %v711
    %787 = vmatpush1.msra.mxu0 %v710
    %788 = vmatprep.subr.mxu0 %v713
    %789 = vmatpush1.msra.mxu0 %v712
    %790 = vmatprep.subr.mxu0 %v715
    %791 = vmatpush1.msra.mxu0 %v714
    %792 = vmatprep.subr.mxu0 %v717
    %793 = vmatpush1.msra.mxu0 %v716
    %794 = vmatprep.subr.mxu0 %v719
    %795 = vmatpush1.msra.mxu0 %v718
    %796 = vmatprep.subr.mxu0 %v721
    %797 = vmatpush1.msra.mxu0 %v720
    %798 = vmatprep.subr.mxu0 %v723
    %799 = vmatpush1.msra.mxu0 %v722
    %800 = vmatprep.subr.mxu0 %v725
    %801 = vmatpush1.msra.mxu0 %v724
    %802 = vmatprep.subr.mxu0 %v727
    %803 = vmatpush1.msra.mxu0 %v726
    %804 = vmatprep.subr.mxu0 %v729
    %805 = vmatpush1.msra.mxu0 %v728
    %806 = vmatprep.subr.mxu0 %v731
    %807 = vmatpush1.msra.mxu0 %v730
    %808 = vmatprep.subr.mxu0 %v733
    %809 = vmatpush1.msra.mxu0 %v732
    %810 = vmatprep.subr.mxu0 %v735
    %811 = vmatpush1.msra.mxu0 %v734
    %812 = vmatprep.subr.mxu0 %v737
    %813 = vmatpush1.msra.mxu0 %v736
    %814 = vmatprep.subr.mxu0 %v739
    %815 = vmatpush1.msra.mxu0 %v738
    %816 = vmatprep.subr.mxu0 %v741
    %817 = vmatpush1.msra.mxu0 %v740
    %818 = vmatprep.subr.mxu0 %v743
    %819 = vmatpush1.msra.mxu0 %v742
    %820 = vmatprep.subr.mxu0 %v745
    %821 = vmatpush1.msra.mxu0 %v744
    %822 = vmatprep.subr.mxu0 %v747
    %823 = vmatpush1.msra.mxu0 %v746
    %824 = vmatprep.subr.mxu0 %v749
    %825 = vmatpush1.msra.mxu0 %v748
    %826 = vmatprep.subr.mxu0 %v751
    %827 = vmatpush1.msra.mxu0 %v750
    %828 = vmatprep.subr.mxu0 %v753
    %829 = vmatpush1.msra.mxu0 %v752
    %830 = vmatprep.subr.mxu0 %v755
    %831 = vmatpush1.msra.mxu0 %v754
    %832 = vmatprep.subr.mxu0 %v757
    %833 = vmatpush1.msra.mxu0 %v756
    %834 = vmatprep.mubr.f32.mxu0 %v687
    %835 = vmatmul.mubr.f32.gmra.mrb[0].mxu0 %v686
    %v836 = vpop.f32.mrb[0].mxu0
    %v837 = vadd.f32 %v763, %v836
    %v838 = vpop.f32.mrb[0].mxu0
    %v839 = vadd.f32 %v767, %v838
    %840 = vmatprep.mubr.f32.mxu0 %v689
    %841 = vmatmul.mubr.f32.gmra.mrb[0].mxu0 %v688
    %v842 = vpop.f32.mrb[0].mxu0
    %v843 = vadd.f32 %v763, %v842
    %v844 = vpop.f32.mrb[0].mxu0
    %v845 = vadd.f32 %v767, %v844
    %846 = vmatprep.mubr.f32.mxu0 %v691
    %847 = vmatmul.mubr.f32.gmra.mrb[0].mxu0 %v690
    %v848 = vpop.f32.mrb[0].mxu0
    %v849 = vadd.f32 %v763, %v848
    %v850 = vpop.f32.mrb[0].mxu0
    %v851 = vadd.f32 %v767, %v850
    %852 = vmatprep.mubr.f32.mxu0 %v693
    %853 = vmatmul.mubr.f32.gmra.mrb[0].mxu0 %v692
    %v854 = vpop.f32.mrb[0].mxu0
    %v855 = vadd.f32 %v763, %v854
    %v856 = vpop.f32.mrb[0].mxu0
    %v857 = vadd.f32 %v767, %v856
    %858 = vdwg.mxu0
    %v859 = vmax.f32 %v837, 0.0
    %v860 = vmax.f32 %v839, 0.0
    %v861 = vmax.f32 %v843, 0.0
    %v862 = vmax.f32 %v845, 0.0
    %v863 = vmax.f32 %v849, 0.0
    %v864 = vmax.f32 %v851, 0.0
    %v865 = vmax.f32 %v855, 0.0
    %v866 = vmax.f32 %v857, 0.0
    %v867 = vld [vmem:[#allocation7] sm:$0xff]
    %v868 = vld [vmem:[#allocation7 + $0x8] sm:$0xff]
    %v869 = vld [vmem:[#allocation7 + $0x10] sm:$0xff]
    %v870 = vld [vmem:[#allocation7 + $0x18] sm:$0xff]
    %v871 = vld [vmem:[#allocation7 + $0x20] sm:$0xff]
    %v872 = vld [vmem:[#allocation7 + $0x28] sm:$0xff]
    %v873 = vld [vmem:[#allocation7 + $0x30] sm:$0xff]
    %v874 = vld [vmem:[#allocation7 + $0x38] sm:$0xff]
    %v875 = vld [vmem:[#allocation7 + $0x40] sm:$0xff]
    %v876 = vld [vmem:[#allocation7 + $0x48] sm:$0xff]
    %v877 = vld [vmem:[#allocation7 + $0x50] sm:$0xff]
    %v878 = vld [vmem:[#allocation7 + $0x58] sm:$0xff]
    %v879 = vld [vmem:[#allocation7 + $0x60] sm:$0xff]
    %v880 = vld [vmem:[#allocation7 + $0x68] sm:$0xff]
    %v881 = vld [vmem:[#allocation7 + $0x70] sm:$0xff]
    %v882 = vld [vmem:[#allocation7 + $0x78] sm:$0xff]
    %v883 = vld [vmem:[#allocation7 + $0x80] sm:$0xff]
    %v884 = vld [vmem:[#allocation7 + $0x88] sm:$0xff]
    %v885 = vld [vmem:[#allocation7 + $0x90] sm:$0xff]
    %v886 = vld [vmem:[#allocation7 + $0x98] sm:$0xff]
    %v887 = vld [vmem:[#allocation7 + $0xa0] sm:$0xff]
    %v888 = vld [vmem:[#allocation7 + $0xa8] sm:$0xff]
    %v889 = vld [vmem:[#allocation7 + $0xb0] sm:$0xff]
    %v890 = vld [vmem:[#allocation7 + $0xb8] sm:$0xff]
    %v891 = vld [vmem:[#allocation7 + $0xc0] sm:$0xff]
    %v892 = vld [vmem:[#allocation7 + $0xc8] sm:$0xff]
    %v893 = vld [vmem:[#allocation7 + $0xd0] sm:$0xff]
    %v894 = vld [vmem:[#allocation7 + $0xd8] sm:$0xff]
    %v895 = vld [vmem:[#allocation7 + $0xe0] sm:$0xff]
    %v896 = vld [vmem:[#allocation7 + $0xe8] sm:$0xff]
    %v897 = vld [vmem:[#allocation7 + $0xf0] sm:$0xff]
    %v898 = vld [vmem:[#allocation7 + $0xf8] sm:$0xff]
    %v899 = vld [vmem:[%s6] sm:$0x1]
    %v901 = vlaneseq
    %v902 = vshrl.u32 %v901, 7
    %v903 = vsub.s32 0, %v902
    %v904 = vrot.slane %v899, %v903
    %906 = vmatprep.subr.mxu0 0.0
    %907 = vmatpush1.msra.mxu0 %v867
    %908 = vmatprep.subr.mxu0 0.0
    %909 = vmatpush1.msra.mxu0 %v868
    %910 = vmatprep.subr.mxu0 0.0
    %911 = vmatpush1.msra.mxu0 %v869
    %912 = vmatprep.subr.mxu0 0.0
    %913 = vmatpush1.msra.mxu0 %v870
    %914 = vmatprep.subr.mxu0 0.0
    %915 = vmatpush1.msra.mxu0 %v871
    %916 = vmatprep.subr.mxu0 0.0
    %917 = vmatpush1.msra.mxu0 %v872
    %918 = vmatprep.subr.mxu0 0.0
    %919 = vmatpush1.msra.mxu0 %v873
    %920 = vmatprep.subr.mxu0 0.0
    %921 = vmatpush1.msra.mxu0 %v874
    %922 = vmatprep.subr.mxu0 0.0
    %923 = vmatpush1.msra.mxu0 %v875
    %924 = vmatprep.subr.mxu0 0.0
    %925 = vmatpush1.msra.mxu0 %v876
    %926 = vmatprep.subr.mxu0 0.0
    %927 = vmatpush1.msra.mxu0 %v877
    %928 = vmatprep.subr.mxu0 0.0
    %929 = vmatpush1.msra.mxu0 %v878
    %930 = vmatprep.subr.mxu0 0.0
    %931 = vmatpush1.msra.mxu0 %v879
    %932 = vmatprep.subr.mxu0 0.0
    %933 = vmatpush1.msra.mxu0 %v880
    %934 = vmatprep.subr.mxu0 0.0
    %935 = vmatpush1.msra.mxu0 %v881
    %936 = vmatprep.subr.mxu0 0.0
    %937 = vmatpush1.msra.mxu0 %v882
    %938 = vmatprep.subr.mxu0 0.0
    %939 = vmatpush1.msra.mxu0 %v883
    %940 = vmatprep.subr.mxu0 0.0
    %941 = vmatpush1.msra.mxu0 %v884
    %942 = vmatprep.subr.mxu0 0.0
    %943 = vmatpush1.msra.mxu0 %v885
    %944 = vmatprep.subr.mxu0 0.0
    %945 = vmatpush1.msra.mxu0 %v886
    %946 = vmatprep.subr.mxu0 0.0
    %947 = vmatpush1.msra.mxu0 %v887
    %948 = vmatprep.subr.mxu0 0.0
    %949 = vmatpush1.msra.mxu0 %v888
    %950 = vmatprep.subr.mxu0 0.0
    %951 = vmatpush1.msra.mxu0 %v889
    %952 = vmatprep.subr.mxu0 0.0
    %953 = vmatpush1.msra.mxu0 %v890
    %954 = vmatprep.subr.mxu0 0.0
    %955 = vmatpush1.msra.mxu0 %v891
    %956 = vmatprep.subr.mxu0 0.0
    %957 = vmatpush1.msra.mxu0 %v892
    %958 = vmatprep.subr.mxu0 0.0
    %959 = vmatpush1.msra.mxu0 %v893
    %960 = vmatprep.subr.mxu0 0.0
    %961 = vmatpush1.msra.mxu0 %v894
    %962 = vmatprep.subr.mxu0 0.0
    %963 = vmatpush1.msra.mxu0 %v895
    %964 = vmatprep.subr.mxu0 0.0
    %965 = vmatpush1.msra.mxu0 %v896
    %966 = vmatprep.subr.mxu0 0.0
    %967 = vmatpush1.msra.mxu0 %v897
    %968 = vmatprep.subr.mxu0 0.0
    %969 = vmatpush1.msra.mxu0 %v898
    %970 = vmatprep.mubr.f32.mxu0 %v860
    %971 = vmatmul.mubr.f32.gmra.mrb[0].mxu0 %v859
    %v972 = vpop.f32.mrb[0].mxu0
    %v973 = vadd.f32 %v904, %v972
    %v974 = vpop.f32.mrb[0].mxu0
    %975 = vmatprep.mubr.f32.mxu0 %v862
    %976 = vmatmul.mubr.f32.gmra.mrb[0].mxu0 %v861
    %v977 = vpop.f32.mrb[0].mxu0
    %v978 = vadd.f32 %v904, %v977
    %v979 = vpop.f32.mrb[0].mxu0
    %980 = vmatprep.mubr.f32.mxu0 %v864
    %981 = vmatmul.mubr.f32.gmra.mrb[0].mxu0 %v863
    %v982 = vpop.f32.mrb[0].mxu0
    %v983 = vadd.f32 %v904, %v982
    %v984 = vpop.f32.mrb[0].mxu0
    %985 = vmatprep.mubr.f32.mxu0 %v866
    %986 = vmatmul.mubr.f32.gmra.mrb[0].mxu0 %v865
    %v987 = vpop.f32.mrb[0].mxu0
    %v988 = vadd.f32 %v904, %v987
    %v989 = vpop.f32.mrb[0].mxu0
    %990 = vdwg.mxu0
    %991 = vst [vmem:[%s7] sm:$0xff] %v973
    %992 = vst [vmem:[%s7 + $0x8] sm:$0xff] %v978
    %993 = vst [vmem:[%s7 + $0x10] sm:$0xff] %v983
    %994 = vst [vmem:[%s7 + $0x18] sm:$0xff] %v988
    // Predicated region
    $region46: #{mlp_forward.1} parent=1 // pred_check
      _
    $region47: #{mlp_forward.1} parent=1 // pred_check_branch
      %996 = sbr.rel (0) target = $region49
    $region48: #{mlp_forward.1} parent=1 // pred_region
      _
    $region49: #{mlp_forward.1} parent=1 // pred_fallthru
      _
    // Predicated region
    $region50: #{mlp_forward.1} parent=1 // pred_check
      _
    $region51: #{mlp_forward.1} parent=1 // pred_check_branch
      %998 = sbr.rel (0) target = $region53
    $region52: #{mlp_forward.1} parent=1 // pred_region
      _
    $region53: #{mlp_forward.1} parent=1 // pred_fallthru
      _
    %999 = vsyncpa [#allocation3], 1
    %1000 = vsyncpa [#allocation5], 1
    %1001 = vsyncpa [#allocation8], 1

</llo_original>
